<compile_context>
chip_gen: v5e
topology: v5e:2x2
jax: 0.10.0
libtpu: 0.0.40
codegen_flags: <defaults>
</compile_context>

<pallas_src>
import functools
import numpy as np
import jax
import jax.numpy as jnp
from jax.experimental import pallas as pl
from jax.experimental.pallas import tpu as pltpu


def _round_up(x, m):
    return (x + m - 1) // m * m


def _tpu_caps():
    """Generation-aware tile caps and scoped-VMEM budget: (TM, TN, TK, vmem_limit_bytes)."""
    try:
        phys = int(pltpu.get_tpu_info().vmem_capacity_bytes)
    except Exception:
        phys = 64 * 1024 * 1024
    if phys >= 96 * 1024 * 1024:
        # v5e / v6e: 128 MiB physical VMEM, lowest HBM BW -> bigger tiles + higher scoped cap.
        return 512, 1024, 2048, 96 * 1024 * 1024
    # v7x: 64 MiB physical -> keep the (<= ~20 MiB) per-step footprint under the 32 MiB scoped limit.
    return 512, 512, 2048, 32 * 1024 * 1024


TM_MAX, TN_MAX, TK_MAX, VMEM_LIMIT = _tpu_caps()


# ---------------------------------------------------------------------------
# Pallas kernels
# ---------------------------------------------------------------------------
def _mm_kernel(*refs, relu, has_res):
    # Tiled matmul, f32 accumulator scratch; epilogue fuses per-column shift (+ residual) + ReLU + cast.
    if has_res:
        a_ref, b_ref, s_ref, r_ref, o_ref, acc_ref = refs
    else:
        a_ref, b_ref, s_ref, o_ref, acc_ref = refs
        r_ref = None
    k = pl.program_id(2)

    @pl.when(k == 0)
    def _init():
        acc_ref[...] = jnp.zeros_like(acc_ref)

    acc_ref[...] += jnp.dot(a_ref[...], b_ref[...], preferred_element_type=jnp.float32)

    @pl.when(k == pl.num_programs(2) - 1)
    def _epilogue():
        out = acc_ref[...] + s_ref[...]
        if has_res:
            out = out + r_ref[...].astype(jnp.float32)
        if relu:
            out = jnp.maximum(out, 0.0)
        o_ref[...] = out.astype(o_ref.dtype)


def _pick_k(K):
    """Return (tk, Kpad).  Prefer a single exact K step; zero-pad only non-128-aligned K > 128."""
    if K <= TK_MAX:
        if K <= 128 or K % 128 == 0:
            return K, K                                  # single step, no padding
        kp = _round_up(K, 128)                           # only the 7x7 / C=64 3x3 im2col hit this
        return kp, kp
    for tk in range(TK_MAX, 127, -128):                  # largest 128-multiple divisor of K
        if K % tk == 0:
            return tk, K
    return 512, _round_up(K, 512)                        # fallback (unused by this network)


def matmul_affine(a, b, shift, *, relu, residual=None, out_dtype=jnp.bfloat16):
    """act(a @ b + shift [+ residual]) with bf16 MXU operands and f32 accumulation.

    M/N boundary blocks are handled by pl.cdiv grids with masked edge stores (no activation pad /
    output slice); rows are only padded when M itself is smaller than one 16-row tile.
    """
    M, K = a.shape
    K2, N = b.shape
    assert K == K2
    tk, Kp = _pick_k(K)
    tn = N if N <= TN_MAX else TN_MAX                    # full dim, or 128-multiple tile (masked edges)
    tm = min(TM_MAX, _round_up(M, 16))                   # bf16 packs 16 sublanes per vreg
    pad_m = tm - M if tm > M else 0                      # only tiny / ragged-below-one-tile M gets padded
    Mp = M + pad_m

    a_p = a.astype(jnp.bfloat16)
    if pad_m or Kp != K:
        a_p = jnp.pad(a_p, ((0, pad_m), (0, Kp - K)))
    b_p = b.astype(jnp.bfloat16)
    if Kp != K:
        b_p = jnp.pad(b_p, ((0, Kp - K), (0, 0)))
    s_p = shift.reshape(1, N).astype(jnp.float32)

    inputs = [a_p, b_p, s_p]
    in_specs = [
        pl.BlockSpec((tm, tk), lambda i, j, k: (i, k)),
        pl.BlockSpec((tk, tn), lambda i, j, k: (k, j)),
        pl.BlockSpec((1, tn), lambda i, j, k: (0, j)),
    ]
    has_res = residual is not None
    if has_res:
        r_p = residual.astype(jnp.bfloat16)
        if pad_m:
            r_p = jnp.pad(r_p, ((0, pad_m), (0, 0)))
        inputs.append(r_p)
        in_specs.append(pl.BlockSpec((tm, tn), lambda i, j, k: (i, j)))

    gm, gn, gk = pl.cdiv(Mp, tm), pl.cdiv(N, tn), Kp // tk
    sem = ("parallel", "parallel", "parallel" if gk == 1 else "arbitrary")
    out = pl.pallas_call(
        functools.partial(_mm_kernel, relu=relu, has_res=has_res),
        out_shape=jax.ShapeDtypeStruct((Mp, N), out_dtype),
        grid_spec=pltpu.PrefetchScalarGridSpec(
            num_scalar_prefetch=0,
            grid=(gm, gn, gk),
            in_specs=in_specs,
            out_specs=pl.BlockSpec((tm, tn), lambda i, j, k: (i, j)),
            scratch_shapes=[pltpu.VMEM((tm, tn), jnp.float32)],
        ),
        compiler_params=pltpu.CompilerParams(
            dimension_semantics=sem, vmem_limit_bytes=VMEM_LIMIT),
    )(*inputs)
    if pad_m:
        out = out[:M]
    return out


def maxpool_3x3_s2_p1(x):
    """3x3 / stride-2 / pad-1 max pool, NHWC.

    The padded input row is viewed as (Wq, 2*C): lanes [0,C) are even columns, [C,2C) odd columns, so the
    three column taps reduce to plain (unstrided) slices + elementwise max in VMEM.  The three row taps are
    a reduction grid axis with an f32 running-max scratch.  No kh*kw tap stack ever touches HBM.
    """
    N, H, W, C = x.shape
    OH = (H - 1) // 2 + 1
    OW = (W - 1) // 2 + 1
    Hp = H + 2
    Wp = _round_up(W + 2, 2)
    Wq = Wp // 2
    assert Wq >= OW + 1
    neg = float(jnp.finfo(x.dtype).min)
    xp = jnp.pad(x, ((0, 0), (1, 1), (1, Wp - W - 1), (0, 0)), constant_values=neg)
    xp = xp.reshape(N, Hp, Wq, 2 * C)                    # even/odd column pairs share one 128-lane group

    def kernel(x_ref, o_ref, acc_ref):
        ki = pl.program_id(2)
        ow, c = o_ref.shape[2], o_ref.shape[3]
        v = x_ref[0, 0]                                  # (Wq, 2C) one padded input row
        a = v[:, :c]                                     # even input columns
        b = v[:, c:]                                     # odd input columns
        pm = jnp.maximum(a, b)                           # max over columns (2*ow, 2*ow+1)
        wmax = jnp.maximum(pm[:ow], a[1:ow + 1])         # + column 2*ow+2
        wmax = wmax.astype(jnp.float32)

        @pl.when(ki == 0)
        def _():
            acc_ref[...] = jnp.full_like(acc_ref, -jnp.inf)

        acc_ref[...] = jnp.maximum(acc_ref[...], wmax)

        @pl.when(ki == pl.num_programs(2) - 1)
        def _():
            o_ref[0, 0] = acc_ref[...].astype(o_ref.dtype)

    return pl.pallas_call(
        kernel,
        out_shape=jax.ShapeDtypeStruct((N, OH, OW, C), x.dtype),
        grid_spec=pltpu.PrefetchScalarGridSpec(
            num_scalar_prefetch=0,
            grid=(N, OH, 3),
            in_specs=[pl.BlockSpec((1, 1, Wq, 2 * C),
                                   lambda n, oh, ki: (n, 2 * oh + ki, 0, 0))],
            out_specs=pl.BlockSpec((1, 1, OW, C), lambda n, oh, ki: (n, oh, 0, 0)),
            scratch_shapes=[pltpu.VMEM((OW, C), jnp.float32)],
        ),
        compiler_params=pltpu.CompilerParams(
            dimension_semantics=("parallel", "parallel", "arbitrary"),
            vmem_limit_bytes=VMEM_LIMIT),
    )(xp)


# ---------------------------------------------------------------------------
# Conv / conv-transpose built on the kernels above (glue = layout only)
# ---------------------------------------------------------------------------
def _im2col(x, kh, kw, stride, pad):
    # TODO(synk): implicit im2col (halo-row manual DMA from a pl.ANY HBM ref, taps folded into the K
    # reduction inside the kernel) would avoid materializing this kh*kw-expanded copy in HBM; only the
    # 7x7 stem and the 3x3 mid-convs take this path (all 1x1 convs are direct matmuls).
    N, H, W, C = x.shape
    xp = jnp.pad(x, ((0, 0), (pad, pad), (pad, pad), (0, 0)))
    OH = (H + 2 * pad - kh) // stride + 1
    OW = (W + 2 * pad - kw) // stride + 1
    taps = [xp[:, i:i + stride * (OH - 1) + 1:stride, j:j + stride * (OW - 1) + 1:stride, :]
            for i in range(kh) for j in range(kw)]
    col = jnp.stack(taps, axis=3)                        # (N, OH, OW, kh*kw, C)
    return col.reshape(N * OH * OW, kh * kw * C), OH, OW


def conv_bn_act(x, w, shift, *, stride, pad, relu, residual=None, out_dtype=jnp.bfloat16):
    """Conv (BN scale pre-folded into w) + shift + optional fused residual + optional ReLU."""
    kh, kw, cin, cout = w.shape
    N = x.shape[0]
    if kh == 1 and kw == 1:
        if stride > 1:                                   # 1x1 stride-s conv == spatial subsample + matmul
            x = x[:, ::stride, ::stride, :]
        _, OH, OW, _ = x.shape
        a = x.reshape(N * OH * OW, cin)
    else:
        a, OH, OW = _im2col(x, kh, kw, stride, pad)
    res = None if residual is None else residual.reshape(N * OH * OW, cout)
    out = matmul_affine(a, w.reshape(kh * kw * cin, cout), shift,
                        relu=relu, residual=res, out_dtype=out_dtype)
    return out.reshape(N, OH, OW, cout)


def conv_transpose32(x, w2, num_classes, kernel=64, stride=32):
    """ConvTranspose2d(k=64, s=32, no bias): one matmul over all feature pixels (bf16 contributions,
    f32 accumulation in the overlap-add buffer) + 2x2-phase col2im overlap-add."""
    # TODO(synk): a Pallas col2im kernel gathering the <=4 contributing phases per 32x32 output block in
    # VMEM would remove the XLA scatter-add passes over the full-resolution buffer.
    N, FH, FW, Cin = x.shape
    assert w2.shape[0] == Cin and kernel % stride == 0
    P = kernel // stride                                 # 2 overlapping 32x32 phases per spatial axis
    contrib = matmul_affine(x.reshape(N * FH * FW, Cin), w2,
                            jnp.zeros((w2.shape[1],), jnp.float32),
                            relu=False, out_dtype=jnp.bfloat16)
    contrib = contrib.reshape(N, FH, FW, P, stride, P, stride, num_classes)
    out = jnp.zeros((N, FH + P - 1, stride, FW + P - 1, stride, num_classes), jnp.float32)
    for ph in range(P):
        for pw in range(P):
            term = jnp.transpose(contrib[:, :, :, ph, :, pw, :, :], (0, 1, 3, 2, 4, 5))
            out = out.at[:, ph:ph + FH, :, pw:pw + FW, :, :].add(term.astype(jnp.float32))
    return out.reshape(N, (FH + P - 1) * stride, (FW + P - 1) * stride, num_classes)


# ---------------------------------------------------------------------------
# Deterministic parameter construction (synthetic, resnet50-shaped, BN folded)
# ---------------------------------------------------------------------------
class ParamGen:
    def __init__(self, key):
        self._key = key
        self._i = 0

    def norm(self, shape):
        k = jax.random.fold_in(self._key, self._i)
        self._i += 1
        return jax.random.normal(k, shape, jnp.float32)


def _he(gen, kh, kw, cin, cout):
    return gen.norm((kh, kw, cin, cout)) * np.sqrt(2.0 / (kh * kw * cin))


def _conv_bn(gen, kh, kw, cin, cout, eps=1e-5):
    w = _he(gen, kh, kw, cin, cout)
    gamma = 1.0 + 0.1 * gen.norm((cout,))
    beta = 0.1 * gen.norm((cout,))
    mean = 0.1 * gen.norm((cout,))
    var = 1.0 + 0.1 * jnp.abs(gen.norm((cout,)))
    s = gamma / jnp.sqrt(var + eps)                      # eval-mode BN scale
    shift = beta - mean * s                              # eval-mode BN shift
    return (w * s).astype(jnp.bfloat16), shift.astype(jnp.float32)   # scale folded into bf16 weight


def _bottleneck_params(gen, cin, mid, cout, stride, downsample):
    p = {'stride': stride}
    p['w1'], p['b1'] = _conv_bn(gen, 1, 1, cin, mid)
    p['w2'], p['b2'] = _conv_bn(gen, 3, 3, mid, mid)
    p['w3'], p['b3'] = _conv_bn(gen, 1, 1, mid, cout)
    if downsample:
        p['wd'], p['bd'] = _conv_bn(gen, 1, 1, cin, cout)
    return p


def make_params(key, num_classes=7):
    gen = ParamGen(key)
    params = {'num_classes': num_classes}
    params['conv1_w'], params['conv1_b'] = _conv_bn(gen, 7, 7, 3, 64)
    cfg = [(64, 256, 3, 1), (128, 512, 4, 2), (256, 1024, 6, 2), (512, 2048, 3, 2)]
    cin = 64
    layers = []
    for mid, cout, nblocks, stride in cfg:
        blocks = []
        for bidx in range(nblocks):
            s = stride if bidx == 0 else 1
            blocks.append(_bottleneck_params(gen, cin, mid, cout, s, downsample=(bidx == 0)))
            cin = cout
        layers.append(blocks)
    params['layers'] = layers

    # classifier: Conv2d(2048, C, 1) + bias, ReLU.  Cout padded to 128 lanes (zero weight/bias -> relu(0)=0).
    cpad = max(_round_up(num_classes, 128), 128)
    w_cls = _he(gen, 1, 1, 2048, num_classes)
    b_cls = 0.1 * gen.norm((num_classes,))
    params['cls_w'] = jnp.pad(w_cls, ((0, 0), (0, 0), (0, 0), (0, cpad - num_classes))).astype(jnp.bfloat16)
    params['cls_b'] = jnp.pad(b_cls, (0, cpad - num_classes)).astype(jnp.float32)

    # upsampling32: ConvTranspose2d(C, C, 64, stride=32, bias=False); weight layout (Cin, KH, KW, Cout).
    w_up = gen.norm((num_classes, 64, 64, num_classes)) * (1.0 / np.sqrt(num_classes * 64 * 64))
    w_up = jnp.pad(w_up, ((0, cpad - num_classes), (0, 0), (0, 0), (0, 0)))  # align Cin to padded classifier
    params['up_w2'] = w_up.reshape(cpad, 64 * 64 * num_classes).astype(jnp.bfloat16)
    return params


# ---------------------------------------------------------------------------
# Forward pass (mirrors ResnetFCN32.forward)
# ---------------------------------------------------------------------------
def bottleneck(x, p):
    s = p['stride']
    h = conv_bn_act(x, p['w1'], p['b1'], stride=1, pad=0, relu=True)
    h = conv_bn_act(h, p['w2'], p['b2'], stride=s, pad=1, relu=True)
    if 'wd' in p:
        identity = conv_bn_act(x, p['wd'], p['bd'], stride=s, pad=0, relu=False)
    else:
        identity = x
    # third 1x1 conv with the residual add + ReLU fused into the matmul epilogue
    return conv_bn_act(h, p['w3'], p['b3'], stride=1, pad=0, relu=True, residual=identity)


def resnet_fcn32_forward(params, x_nchw):
    # TODO(synk): the tiny layer3/layer4 bottlenecks (spatial <= 2x2) could be chained inside one
    # pallas_call with intermediates in VMEM scratch to amortize per-call latency.
    x = jnp.transpose(x_nchw, (0, 2, 3, 1)).astype(jnp.bfloat16)   # NCHW -> NHWC, bf16 activations
    o = conv_bn_act(x, params['conv1_w'], params['conv1_b'], stride=2, pad=3, relu=True)
    o = maxpool_3x3_s2_p1(o)
    for blocks in params['layers']:
        for p in blocks:
            o = bottleneck(o, p)
    # classifier: Conv2d(2048, C, 1) + bias then ReLU (C padded to 128 lanes; padded channels stay 0)
    o = conv_bn_act(o, params['cls_w'], params['cls_b'], stride=1, pad=0, relu=True)
    # upsampling32: ConvTranspose2d(C, C, 64, stride=32, bias=False)
    o = conv_transpose32(o, params['up_w2'], params['num_classes'])
    H_in, W_in = x_nchw.shape[2], x_nchw.shape[3]
    cy = (o.shape[1] - H_in) // 2
    cx = (o.shape[2] - W_in) // 2
    o = o[:, cy:cy + H_in, cx:cx + W_in, :]
    return jnp.transpose(o, (0, 3, 1, 2)).astype(jnp.float32)      # NHWC -> NCHW


if __name__ == "__main__":
    key = jax.random.PRNGKey(0)
    pkey, xkey, k1, k2, k3, k4, k5 = jax.random.split(key, 7)

    # --- small self-checks of the two Pallas kernels against plain-JAX references ---
    a = jax.random.normal(k1, (70, 576), jnp.float32)              # exercises M-pad + K-pad paths
    b = 0.05 * jax.random.normal(k2, (576, 256), jnp.float32)
    s = jax.random.normal(k3, (256,), jnp.float32)
    r = jax.random.normal(k4, (70, 256), jnp.float32)
    got = matmul_affine(a, b, s, relu=True, residual=r).astype(jnp.float32)
    a16 = a.astype(jnp.bfloat16).astype(jnp.float32)
    b16 = b.astype(jnp.bfloat16).astype(jnp.float32)
    r16 = r.astype(jnp.bfloat16).astype(jnp.float32)
    ref = jnp.maximum(jnp.dot(a16, b16, precision=jax.lax.Precision.HIGHEST) + s[None, :] + r16, 0.0)
    ref = ref.astype(jnp.bfloat16).astype(jnp.float32)
    err = float(jnp.max(jnp.abs(got - ref)))
    assert err <= 0.03 * float(jnp.max(jnp.abs(ref))) + 1e-2, err

    xm = jax.random.normal(k5, (2, 8, 8, 64), jnp.float32).astype(jnp.bfloat16)
    pooled = maxpool_3x3_s2_p1(xm)
    pref = jax.lax.reduce_window(xm.astype(jnp.float32), -jnp.inf, jax.lax.max,
                                 (1, 3, 3, 1), (1, 2, 2, 1),
                                 ((0, 0), (1, 1), (1, 1), (0, 0))).astype(jnp.bfloat16)
    assert bool(jnp.all(pooled == pref))

    # --- full forward pass ---
    params = make_params(pkey, num_classes=7)
    x = jax.random.normal(xkey, (2, 3, 16, 16), jnp.float32)       # ResNet-50 stem requires 3 input channels
    fwd = jax.jit(functools.partial(resnet_fcn32_forward, params))
    out = jax.block_until_ready(fwd(x))
    assert out.shape == (2, 7, 16, 16), out.shape
    assert bool(jnp.all(jnp.isfinite(out)))
    print("KERNEL_OK")
</pallas_src>

<mosaic_0001>
module attributes {stable_mosaic.version = 11 : i64} {
  func.func @_mm_kernel(%arg0: i32, %arg1: i32, %arg2: i32, %arg3: memref<80x640xbf16, #tpu.memory_space<vmem>>, %arg4: memref<640x256xbf16, #tpu.memory_space<vmem>>, %arg5: memref<1x256xf32, #tpu.memory_space<vmem>>, %arg6: memref<80x256xbf16, #tpu.memory_space<vmem>>, %arg7: memref<80x256xbf16, #tpu.memory_space<vmem>>, %arg8: memref<80x256xf32, #tpu.memory_space<vmem>>) attributes {dimension_semantics = [#tpu.dimension_semantics<parallel>, #tpu.dimension_semantics<parallel>, #tpu.dimension_semantics<parallel>], iteration_bounds = array<i64: 1, 1, 1>, scalar_prefetch = 0 : i64, scratch_operands = 1 : i64, tpu.core_type = #tpu.core_type<tc>, window_params = [{transform_indices = @transform_0, window_bounds = array<i64: 80, 640>}, {transform_indices = @transform_1, window_bounds = array<i64: 640, 256>}, {transform_indices = @transform_2, window_bounds = array<i64: 1, 256>}, {transform_indices = @transform_3, window_bounds = array<i64: 80, 256>}, {transform_indices = @transform_4, window_bounds = array<i64: 80, 256>}]} {
    %c0_i32 = arith.constant 0 : i32
    %0 = arith.cmpi eq, %arg2, %c0_i32 : i32
    %1 = arith.extui %0 : i1 to i32
    %c0_i32_0 = arith.constant 0 : i32
    %2 = arith.cmpi ne, %1, %c0_i32_0 : i32
    scf.if %2 {
      %cst_10 = arith.constant 0.000000e+00 : f32
      %12 = vector.broadcast %cst_10 : f32 to vector<80x256xf32>
      %c0_11 = arith.constant 0 : index
      %c0_12 = arith.constant 0 : index
      %13 = vector.load %arg8[%c0_11, %c0_12] : memref<80x256xf32, #tpu.memory_space<vmem>>, vector<80x256xf32>
      tpu.vector_store %arg8[%c0_11, %c0_12], %12 {strides = array<i32>} : memref<80x256xf32, #tpu.memory_space<vmem>>, vector<80x256xf32>,
    } else {
    }
    %c0 = arith.constant 0 : index
    %c0_1 = arith.constant 0 : index
    %3 = vector.load %arg8[%c0, %c0_1] : memref<80x256xf32, #tpu.memory_space<vmem>>, vector<80x256xf32>
    %c0_2 = arith.constant 0 : index
    %c0_3 = arith.constant 0 : index
    %4 = vector.load %arg3[%c0_2, %c0_3] : memref<80x640xbf16, #tpu.memory_space<vmem>>, vector<80x640xbf16>
    %c0_4 = arith.constant 0 : index
    %c0_5 = arith.constant 0 : index
    %5 = vector.load %arg4[%c0_4, %c0_5] : memref<640x256xbf16, #tpu.memory_space<vmem>>, vector<640x256xbf16>
    %cst = arith.constant dense<0.000000e+00> : vector<80x256xf32>
    %6 = tpu.matmul %4, %5, %cst {dimension_numbers = #tpu.dot_dimension_numbers<[1], [0], [0], [1], [0, 0, 1, 1], [], []>} : vector<80x640xbf16>, vector<640x256xbf16>, vector<80x256xf32> -> vector<80x256xf32>
    %7 = arith.addf %3, %6 : vector<80x256xf32>
    %c0_6 = arith.constant 0 : index
    %c0_7 = arith.constant 0 : index
    %8 = vector.load %arg8[%c0_6, %c0_7] : memref<80x256xf32, #tpu.memory_space<vmem>>, vector<80x256xf32>
    tpu.vector_store %arg8[%c0_6, %c0_7], %7 {strides = array<i32>} : memref<80x256xf32, #tpu.memory_space<vmem>>, vector<80x256xf32>,
    %c0_i32_8 = arith.constant 0 : i32
    %9 = arith.cmpi eq, %arg2, %c0_i32_8 : i32
    %10 = arith.extui %9 : i1 to i32
    %c0_i32_9 = arith.constant 0 : i32
    %11 = arith.cmpi ne, %10, %c0_i32_9 : i32
    scf.if %11 {
      %c0_10 = arith.constant 0 : index
      %c0_11 = arith.constant 0 : index
      %12 = vector.load %arg8[%c0_10, %c0_11] : memref<80x256xf32, #tpu.memory_space<vmem>>, vector<80x256xf32>
      %c0_12 = arith.constant 0 : index
      %c0_13 = arith.constant 0 : index
      %13 = vector.load %arg5[%c0_12, %c0_13] : memref<1x256xf32, #tpu.memory_space<vmem>>, vector<1x256xf32>
      %14 = vector.broadcast %13 : vector<1x256xf32> to vector<80x256xf32>
      %15 = arith.addf %12, %14 : vector<80x256xf32>
      %c0_14 = arith.constant 0 : index
      %c0_15 = arith.constant 0 : index
      %16 = vector.load %arg6[%c0_14, %c0_15] : memref<80x256xbf16, #tpu.memory_space<vmem>>, vector<80x256xbf16>
      %17 = arith.extf %16 : vector<80x256xbf16> to vector<80x256xf32>
      %18 = arith.addf %15, %17 : vector<80x256xf32>
      %cst_16 = arith.constant 0.000000e+00 : f32
      %19 = vector.broadcast %cst_16 : f32 to vector<80x256xf32>
      %20 = arith.maximumf %18, %19 : vector<80x256xf32>
      %21 = arith.truncf %20 : vector<80x256xf32> to vector<80x256xbf16>
      %c0_17 = arith.constant 0 : index
      %c0_18 = arith.constant 0 : index
      %22 = vector.load %arg7[%c0_17, %c0_18] : memref<80x256xbf16, #tpu.memory_space<vmem>>, vector<80x256xbf16>
      tpu.vector_store %arg7[%c0_17, %c0_18], %21 {strides = array<i32>} : memref<80x256xbf16, #tpu.memory_space<vmem>>, vector<80x256xbf16>,
    } else {
    }
    return
  }
  func.func @transform_0(%arg0: i32, %arg1: i32, %arg2: i32) -> (i32, i32) {
    %c0_i32 = arith.constant 0 : i32
    return %arg0, %arg2 : i32, i32
  }
  func.func @transform_1(%arg0: i32, %arg1: i32, %arg2: i32) -> (i32, i32) {
    %c0_i32 = arith.constant 0 : i32
    return %arg2, %arg1 : i32, i32
  }
  func.func @transform_2(%arg0: i32, %arg1: i32, %arg2: i32) -> (i32, i32) {
    %c0_i32 = arith.constant 0 : i32
    %c0_i32_0 = arith.constant 0 : i32
    return %c0_i32, %arg1 : i32, i32
  }
  func.func @transform_3(%arg0: i32, %arg1: i32, %arg2: i32) -> (i32, i32) {
    %c0_i32 = arith.constant 0 : i32
    return %arg0, %arg1 : i32, i32
  }
  func.func @transform_4(%arg0: i32, %arg1: i32, %arg2: i32) -> (i32, i32) {
    %c0_i32 = arith.constant 0 : i32
    return %arg0, %arg1 : i32, i32
  }
}

</mosaic_0001>

<llo_original>
// kernel: tpu_custom_call.1
$region0: #{tpu_custom_call.1}
  #allocation0 [shape = 'u32[]', space=smem, size = 0x4, offset = 0x4, fixed_abs, tag = 'smem constant byte address 0x4 - core index']
  #allocation1 [shape = 'u32[72,128]{1,0:T(1,128)}', space=vmem, size = 0x9000, scoped, tag = 'internal scratch']
  #allocation2 [shape = 'f32[80,256]{1,0:T(8,128)}', space=vmem, size = 0x14000, scoped, tag = 'scratch operand']
  %s0 = inlined_call_operand.hbm [shape: bf16[80,640], index: 0, kind: input, shape index: {}]
  %s1 = inlined_call_operand.hbm [shape: bf16[640,256], index: 1, kind: input, shape index: {}]
  %s2 = inlined_call_operand.hbm [shape: f32[1,256], index: 2, kind: input, shape index: {}]
  %s3 = inlined_call_operand.hbm [shape: bf16[80,256], index: 3, kind: input, shape index: {}]
  %s4 = inlined_call_operand.hbm [shape: bf16[80,256], index: 4, kind: output, shape index: {}]
  %s5 = sld [smem:[#allocation0]]
  $region50: #{tpu_custom_call.1} parent=0
    _
  %s7 = ssub.s32 1, %s5
  %s8 = scalar_select 0, %s7, %s5
  $region1: #{tpu_custom_call.1} parent=0
    #allocation3 [shape = 'u8[102400]{0}', space=vmem, size = 0x19000, scoped, tag = 'input window, operand 0, single buffered']
    #allocation4 [shape = 's32[1]{0}', space=sflag, size = 0x4, scoped, tag = 'scoped memory for tpu_custom_call.1']
    #allocation5 [shape = 's32[1]{0}', space=sflag, size = 0x4, scoped, tag = 'scoped memory for tpu_custom_call.1']
    #allocation6 [shape = 'u8[327680]{0}', space=vmem, size = 0x50000, scoped, tag = 'input window, operand 1, single buffered']
    #allocation7 [shape = 's32[1]{0}', space=sflag, size = 0x4, scoped, tag = 'scoped memory for tpu_custom_call.1']
    #allocation8 [shape = 'u8[1024]{0}', space=vmem, size = 0x400, scoped, tag = 'input window, operand 2, single buffered']
    #allocation9 [shape = 'u8[40960]{0}', space=vmem, size = 0xa000, scoped, tag = 'input window, operand 3, single buffered']
    #allocation10 [shape = 's32[1]{0}', space=sflag, size = 0x4, scoped, tag = 'scoped memory for tpu_custom_call.1']
    #allocation11 [shape = 'u8[40960]{0}', space=vmem, size = 0xa000, scoped, tag = 'output window, operand 0, single buffered']
    %9 = vsyncpa [#allocation4], 0
    %10 = vsyncpa [#allocation7], 0
    %11 = vsyncpa [#allocation10], 0
    %12 = vsyncpa [#allocation5], 0
    // Predicated region
    $region2: #{tpu_custom_call.1} parent=1 // pred_check
      _
    $region3: #{tpu_custom_call.1} parent=1 // pred_check_branch
      %14 = sbr.rel (0) target = $region5
    $region4: #{tpu_custom_call.1} parent=1 // pred_region
      %16 = vsyncadd [#allocation4], 0
      %s17 = sshll.u32 %s0, 4
      %s18 = int_to_ptr.hbm [resolvable:$true] %s17
      %s19 = sshll.u32 [#allocation3], 4
      %s20 = int_to_ptr.vmem [resolvable:$true] %s19
      %25 = dma.hbm_to_vmem [thread:$0]  %s18, 3200, %s20, [#allocation4], 320, 320, 20
    $region5: #{tpu_custom_call.1} parent=1 // pred_fallthru
      _
    // Predicated region
    $region6: #{tpu_custom_call.1} parent=1 // pred_check
      _
    $region7: #{tpu_custom_call.1} parent=1 // pred_check_branch
      %27 = sbr.rel (0) target = $region9
    $region8: #{tpu_custom_call.1} parent=1 // pred_region
      %29 = vsyncadd [#allocation7], 0
      %s30 = sshll.u32 %s1, 4
      %s31 = int_to_ptr.hbm [resolvable:$true] %s30
      %s32 = sshll.u32 [#allocation6], 4
      %s33 = int_to_ptr.vmem [resolvable:$true] %s32
      %38 = dma.hbm_to_vmem [thread:$0]  %s31, 10240, %s33, [#allocation7], 128, 128, 8
    $region9: #{tpu_custom_call.1} parent=1 // pred_fallthru
      _
    // Predicated region
    $region10: #{tpu_custom_call.1} parent=1 // pred_check
      _
    $region11: #{tpu_custom_call.1} parent=1 // pred_check_branch
      %40 = sbr.rel (0) target = $region13
    $region12: #{tpu_custom_call.1} parent=1 // pred_region
      %42 = vsyncadd [#allocation7], 0
      %s44 = sshll.u32 %s2, 4
      %s45 = int_to_ptr.hbm [resolvable:$true] %s44
      %s46 = sshll.u32 [#allocation8], 4
      %s47 = int_to_ptr.vmem [resolvable:$true] %s46
      %49 = dma.hbm_to_vmem [thread:$0]  %s45, 32, %s47, [#allocation7]
    $region13: #{tpu_custom_call.1} parent=1 // pred_fallthru
      _
    // Predicated region
    $region14: #{tpu_custom_call.1} parent=1 // pred_check
      _
    $region15: #{tpu_custom_call.1} parent=1 // pred_check_branch
      %51 = sbr.rel (0) target = $region17
    $region16: #{tpu_custom_call.1} parent=1 // pred_region
      %53 = vsyncadd [#allocation10], 0
      %s54 = sshll.u32 %s3, 4
      %s55 = int_to_ptr.hbm [resolvable:$true] %s54
      %s56 = sshll.u32 [#allocation9], 4
      %s57 = int_to_ptr.vmem [resolvable:$true] %s56
      %62 = dma.hbm_to_vmem [thread:$0]  %s55, 1280, %s57, [#allocation10], 128, 128, 8
    $region17: #{tpu_custom_call.1} parent=1 // pred_fallthru
      _
    // Predicated region
    $region18: #{tpu_custom_call.1} parent=1 // pred_check
      _
    $region19: #{tpu_custom_call.1} parent=1 // pred_check_branch
      %64 = sbr.rel (0) target = $region21
    $region20: #{tpu_custom_call.1} parent=1 // pred_region
      %66 = dma.done [#allocation4], 3200
    $region21: #{tpu_custom_call.1} parent=1 // pred_fallthru
      _
    // Predicated region
    $region22: #{tpu_custom_call.1} parent=1 // pred_check
      _
    $region23: #{tpu_custom_call.1} parent=1 // pred_check_branch
      %68 = sbr.rel (0) target = $region25
    $region24: #{tpu_custom_call.1} parent=1 // pred_region
      %70 = dma.done [#allocation7], 10240
    $region25: #{tpu_custom_call.1} parent=1 // pred_fallthru
      _
    // Predicated region
    $region26: #{tpu_custom_call.1} parent=1 // pred_check
      _
    $region27: #{tpu_custom_call.1} parent=1 // pred_check_branch
      %72 = sbr.rel (0) target = $region29
    $region28: #{tpu_custom_call.1} parent=1 // pred_region
      %74 = dma.done [#allocation7], 32
    $region29: #{tpu_custom_call.1} parent=1 // pred_fallthru
      _
    // Predicated region
    $region30: #{tpu_custom_call.1} parent=1 // pred_check
      _
    $region31: #{tpu_custom_call.1} parent=1 // pred_check_branch
      %76 = sbr.rel (0) target = $region33
    $region32: #{tpu_custom_call.1} parent=1 // pred_region
      %78 = dma.done [#allocation10], 1280
    $region33: #{tpu_custom_call.1} parent=1 // pred_fallthru
      _
    %p79 = scmp.eq.s32.totalorder 0, 0
    // Predicated region
    $region34: #{tpu_custom_call.1} parent=1 // pred_check
      %p80 = pneg %p79
    $region35: #{tpu_custom_call.1} parent=1 // pred_check_branch
      %82 = sbr.rel (%p80) target = $region37
    $region36: #{tpu_custom_call.1} parent=1 // pred_region
      %83 = vst [vmem:[#allocation2] sm:$0xff] 0.0
      %84 = vst [vmem:[#allocation2 + $0x8] sm:$0xff] 0.0
      %85 = vst [vmem:[#allocation2 + $0x10] sm:$0xff] 0.0
      %86 = vst [vmem:[#allocation2 + $0x18] sm:$0xff] 0.0
      %87 = vst [vmem:[#allocation2 + $0x20] sm:$0xff] 0.0
      %88 = vst [vmem:[#allocation2 + $0x28] sm:$0xff] 0.0
      %89 = vst [vmem:[#allocation2 + $0x30] sm:$0xff] 0.0
      %90 = vst [vmem:[#allocation2 + $0x38] sm:$0xff] 0.0
      %91 = vst [vmem:[#allocation2 + $0x40] sm:$0xff] 0.0
      %92 = vst [vmem:[#allocation2 + $0x48] sm:$0xff] 0.0
      %93 = vst [vmem:[#allocation2 + $0x50] sm:$0xff] 0.0
      %94 = vst [vmem:[#allocation2 + $0x58] sm:$0xff] 0.0
      %95 = vst [vmem:[#allocation2 + $0x60] sm:$0xff] 0.0
      %96 = vst [vmem:[#allocation2 + $0x68] sm:$0xff] 0.0
      %97 = vst [vmem:[#allocation2 + $0x70] sm:$0xff] 0.0
      %98 = vst [vmem:[#allocation2 + $0x78] sm:$0xff] 0.0
      %99 = vst [vmem:[#allocation2 + $0x80] sm:$0xff] 0.0
      %100 = vst [vmem:[#allocation2 + $0x88] sm:$0xff] 0.0
      %101 = vst [vmem:[#allocation2 + $0x90] sm:$0xff] 0.0
      %102 = vst [vmem:[#allocation2 + $0x98] sm:$0xff] 0.0
    $region37: #{tpu_custom_call.1} parent=1 // pred_fallthru
      _
    %v103 = vld [vmem:[#allocation2] sm:$0xff]
    %v104 = vld [vmem:[#allocation2 + $0x8] sm:$0xff]
    %v105 = vld [vmem:[#allocation2 + $0x10] sm:$0xff]
    %v106 = vld [vmem:[#allocation2 + $0x18] sm:$0xff]
    %v107 = vld [vmem:[#allocation2 + $0x20] sm:$0xff]
    %v108 = vld [vmem:[#allocation2 + $0x28] sm:$0xff]
    %v109 = vld [vmem:[#allocation2 + $0x30] sm:$0xff]
    %v110 = vld [vmem:[#allocation2 + $0x38] sm:$0xff]
    %v111 = vld [vmem:[#allocation2 + $0x40] sm:$0xff]
    %v112 = vld [vmem:[#allocation2 + $0x48] sm:$0xff]
    %v113 = vld [vmem:[#allocation2 + $0x50] sm:$0xff]
    %v114 = vld [vmem:[#allocation2 + $0x58] sm:$0xff]
    %v115 = vld [vmem:[#allocation2 + $0x60] sm:$0xff]
    %v116 = vld [vmem:[#allocation2 + $0x68] sm:$0xff]
    %v117 = vld [vmem:[#allocation2 + $0x70] sm:$0xff]
    %v118 = vld [vmem:[#allocation2 + $0x78] sm:$0xff]
    %v119 = vld [vmem:[#allocation2 + $0x80] sm:$0xff]
    %v120 = vld [vmem:[#allocation2 + $0x88] sm:$0xff]
    %v121 = vld [vmem:[#allocation2 + $0x90] sm:$0xff]
    %v122 = vld [vmem:[#allocation2 + $0x98] sm:$0xff]
    %v123 = vld [vmem:[#allocation3] sm:$0xff]
    %v124 = vld [vmem:[#allocation3 + $0x8] sm:$0xff]
    %v125 = vld [vmem:[#allocation3 + $0x10] sm:$0xf]
    %v126 = vld [vmem:[#allocation3 + $0x14] sm:$0xff]
    %v127 = vld [vmem:[#allocation3 + $0x1c] sm:$0xff]
    %v128 = vld [vmem:[#allocation3 + $0x24] sm:$0xf]
    %v129 = vld [vmem:[#allocation3 + $0x28] sm:$0xff]
    %v130 = vld [vmem:[#allocation3 + $0x30] sm:$0xff]
    %v131 = vld [vmem:[#allocation3 + $0x38] sm:$0xf]
    %v132 = vld [vmem:[#allocation3 + $0x3c] sm:$0xff]
    %v133 = vld [vmem:[#allocation3 + $0x44] sm:$0xff]
    %v134 = vld [vmem:[#allocation3 + $0x4c] sm:$0xf]
    %v135 = vld [vmem:[#allocation3 + $0x50] sm:$0xff]
    %v136 = vld [vmem:[#allocation3 + $0x58] sm:$0xff]
    %v137 = vld [vmem:[#allocation3 + $0x60] sm:$0xf]
    %v138 = vld [vmem:[#allocation3 + $0x64] sm:$0xff]
    %v139 = vld [vmem:[#allocation3 + $0x6c] sm:$0xff]
    %v140 = vld [vmem:[#allocation3 + $0x74] sm:$0xf]
    %v141 = vld [vmem:[#allocation3 + $0x78] sm:$0xff]
    %v142 = vld [vmem:[#allocation3 + $0x80] sm:$0xff]
    %v143 = vld [vmem:[#allocation3 + $0x88] sm:$0xf]
    %v144 = vld [vmem:[#allocation3 + $0x8c] sm:$0xff]
    %v145 = vld [vmem:[#allocation3 + $0x94] sm:$0xff]
    %v146 = vld [vmem:[#allocation3 + $0x9c] sm:$0xf]
    %v147 = vld [vmem:[#allocation3 + $0xa0] sm:$0xff]
    %v148 = vld [vmem:[#allocation3 + $0xa8] sm:$0xff]
    %v149 = vld [vmem:[#allocation3 + $0xb0] sm:$0xf]
    %v150 = vld [vmem:[#allocation3 + $0xb4] sm:$0xff]
    %v151 = vld [vmem:[#allocation3 + $0xbc] sm:$0xff]
    %v152 = vld [vmem:[#allocation3 + $0xc4] sm:$0xf]
    %v153 = vld [vmem:[#allocation6] sm:$0xff]
    %v154 = vld [vmem:[#allocation6 + $0x8] sm:$0xff]
    %v155 = vld [vmem:[#allocation6 + $0x10] sm:$0xff]
    %v156 = vld [vmem:[#allocation6 + $0x18] sm:$0xff]
    %v157 = vld [vmem:[#allocation6 + $0x20] sm:$0xff]
    %v158 = vld [vmem:[#allocation6 + $0x28] sm:$0xff]
    %v159 = vld [vmem:[#allocation6 + $0x30] sm:$0xff]
    %v160 = vld [vmem:[#allocation6 + $0x38] sm:$0xff]
    %v161 = vld [vmem:[#allocation6 + $0x40] sm:$0xff]
    %v162 = vld [vmem:[#allocation6 + $0x48] sm:$0xff]
    %v163 = vld [vmem:[#allocation6 + $0x50] sm:$0xff]
    %v164 = vld [vmem:[#allocation6 + $0x58] sm:$0xff]
    %v165 = vld [vmem:[#allocation6 + $0x60] sm:$0xff]
    %v166 = vld [vmem:[#allocation6 + $0x68] sm:$0xff]
    %v167 = vld [vmem:[#allocation6 + $0x70] sm:$0xff]
    %v168 = vld [vmem:[#allocation6 + $0x78] sm:$0xff]
    %v169 = vld [vmem:[#allocation6 + $0x80] sm:$0xff]
    %v170 = vld [vmem:[#allocation6 + $0x88] sm:$0xff]
    %v171 = vld [vmem:[#allocation6 + $0x90] sm:$0xff]
    %v172 = vld [vmem:[#allocation6 + $0x98] sm:$0xff]
    %v173 = vld [vmem:[#allocation6 + $0xa0] sm:$0xff]
    %v174 = vld [vmem:[#allocation6 + $0xa8] sm:$0xff]
    %v175 = vld [vmem:[#allocation6 + $0xb0] sm:$0xff]
    %v176 = vld [vmem:[#allocation6 + $0xb8] sm:$0xff]
    %v177 = vld [vmem:[#allocation6 + $0xc0] sm:$0xff]
    %v178 = vld [vmem:[#allocation6 + $0xc8] sm:$0xff]
    %v179 = vld [vmem:[#allocation6 + $0xd0] sm:$0xff]
    %v180 = vld [vmem:[#allocation6 + $0xd8] sm:$0xff]
    %v181 = vld [vmem:[#allocation6 + $0xe0] sm:$0xff]
    %v182 = vld [vmem:[#allocation6 + $0xe8] sm:$0xff]
    %v183 = vld [vmem:[#allocation6 + $0xf0] sm:$0xff]
    %v184 = vld [vmem:[#allocation6 + $0xf8] sm:$0xff]
    %v185 = vld [vmem:[#allocation6 + $0x100] sm:$0xff]
    %v186 = vld [vmem:[#allocation6 + $0x108] sm:$0xff]
    %v187 = vld [vmem:[#allocation6 + $0x110] sm:$0xff]
    %v188 = vld [vmem:[#allocation6 + $0x118] sm:$0xff]
    %v189 = vld [vmem:[#allocation6 + $0x120] sm:$0xff]
    %v190 = vld [vmem:[#allocation6 + $0x128] sm:$0xff]
    %v191 = vld [vmem:[#allocation6 + $0x130] sm:$0xff]
    %v192 = vld [vmem:[#allocation6 + $0x138] sm:$0xff]
    %v193 = vld [vmem:[#allocation6 + $0x140] sm:$0xff]
    %v194 = vld [vmem:[#allocation6 + $0x148] sm:$0xff]
    %v195 = vld [vmem:[#allocation6 + $0x150] sm:$0xff]
    %v196 = vld [vmem:[#allocation6 + $0x158] sm:$0xff]
    %v197 = vld [vmem:[#allocation6 + $0x160] sm:$0xff]
    %v198 = vld [vmem:[#allocation6 + $0x168] sm:$0xff]
    %v199 = vld [vmem:[#allocation6 + $0x170] sm:$0xff]
    %v200 = vld [vmem:[#allocation6 + $0x178] sm:$0xff]
    %v201 = vld [vmem:[#allocation6 + $0x180] sm:$0xff]
    %v202 = vld [vmem:[#allocation6 + $0x188] sm:$0xff]
    %v203 = vld [vmem:[#allocation6 + $0x190] sm:$0xff]
    %v204 = vld [vmem:[#allocation6 + $0x198] sm:$0xff]
    %v205 = vld [vmem:[#allocation6 + $0x1a0] sm:$0xff]
    %v206 = vld [vmem:[#allocation6 + $0x1a8] sm:$0xff]
    %v207 = vld [vmem:[#allocation6 + $0x1b0] sm:$0xff]
    %v208 = vld [vmem:[#allocation6 + $0x1b8] sm:$0xff]
    %v209 = vld [vmem:[#allocation6 + $0x1c0] sm:$0xff]
    %v210 = vld [vmem:[#allocation6 + $0x1c8] sm:$0xff]
    %v211 = vld [vmem:[#allocation6 + $0x1d0] sm:$0xff]
    %v212 = vld [vmem:[#allocation6 + $0x1d8] sm:$0xff]
    %v213 = vld [vmem:[#allocation6 + $0x1e0] sm:$0xff]
    %v214 = vld [vmem:[#allocation6 + $0x1e8] sm:$0xff]
    %v215 = vld [vmem:[#allocation6 + $0x1f0] sm:$0xff]
    %v216 = vld [vmem:[#allocation6 + $0x1f8] sm:$0xff]
    %v217 = vld [vmem:[#allocation6 + $0x200] sm:$0xff]
    %v218 = vld [vmem:[#allocation6 + $0x208] sm:$0xff]
    %v219 = vld [vmem:[#allocation6 + $0x210] sm:$0xff]
    %v220 = vld [vmem:[#allocation6 + $0x218] sm:$0xff]
    %v221 = vld [vmem:[#allocation6 + $0x220] sm:$0xff]
    %v222 = vld [vmem:[#allocation6 + $0x228] sm:$0xff]
    %v223 = vld [vmem:[#allocation6 + $0x230] sm:$0xff]
    %v224 = vld [vmem:[#allocation6 + $0x238] sm:$0xff]
    %v225 = vld [vmem:[#allocation6 + $0x240] sm:$0xff]
    %v226 = vld [vmem:[#allocation6 + $0x248] sm:$0xff]
    %v227 = vld [vmem:[#allocation6 + $0x250] sm:$0xff]
    %v228 = vld [vmem:[#allocation6 + $0x258] sm:$0xff]
    %v229 = vld [vmem:[#allocation6 + $0x260] sm:$0xff]
    %v230 = vld [vmem:[#allocation6 + $0x268] sm:$0xff]
    %v231 = vld [vmem:[#allocation6 + $0x270] sm:$0xff]
    %v232 = vld [vmem:[#allocation6 + $0x278] sm:$0xff]
    %v263 = vunpack.c.l.b16 %v123
    %v264 = vunpack.c.h.b16 %v123
    %v265 = vunpack.c.l.b16 %v124
    %v266 = vunpack.c.h.b16 %v124
    %v267 = vunpack.c.l.b16 %v125
    %v268 = vunpack.c.l.b16 %v126
    %v269 = vunpack.c.h.b16 %v126
    %v270 = vunpack.c.l.b16 %v127
    %v271 = vunpack.c.h.b16 %v127
    %v272 = vunpack.c.l.b16 %v128
    %v273 = vunpack.c.l.b16 %v129
    %v274 = vunpack.c.h.b16 %v129
    %v275 = vunpack.c.l.b16 %v130
    %v276 = vunpack.c.h.b16 %v130
    %v277 = vunpack.c.l.b16 %v131
    %v278 = vunpack.c.l.b16 %v132
    %v279 = vunpack.c.h.b16 %v132
    %v280 = vunpack.c.l.b16 %v133
    %v281 = vunpack.c.h.b16 %v133
    %v282 = vunpack.c.l.b16 %v134
    %v283 = vunpack.c.l.b16 %v135
    %v284 = vunpack.c.h.b16 %v135
    %v285 = vunpack.c.l.b16 %v136
    %v286 = vunpack.c.h.b16 %v136
    %v287 = vunpack.c.l.b16 %v137
    %v288 = vunpack.c.l.b16 %v138
    %v289 = vunpack.c.h.b16 %v138
    %v290 = vunpack.c.l.b16 %v139
    %v291 = vunpack.c.h.b16 %v139
    %v292 = vunpack.c.l.b16 %v140
    %v293 = vunpack.c.l.b16 %v141
    %v294 = vunpack.c.h.b16 %v141
    %v295 = vunpack.c.l.b16 %v142
    %v296 = vunpack.c.h.b16 %v142
    %v297 = vunpack.c.l.b16 %v143
    %v298 = vunpack.c.l.b16 %v144
    %v299 = vunpack.c.h.b16 %v144
    %v300 = vunpack.c.l.b16 %v145
    %v301 = vunpack.c.h.b16 %v145
    %v302 = vunpack.c.l.b16 %v146
    %v303 = vunpack.c.l.b16 %v147
    %v304 = vunpack.c.h.b16 %v147
    %v305 = vunpack.c.l.b16 %v148
    %v306 = vunpack.c.h.b16 %v148
    %v307 = vunpack.c.l.b16 %v149
    %v308 = vunpack.c.l.b16 %v150
    %v309 = vunpack.c.h.b16 %v150
    %v310 = vunpack.c.l.b16 %v151
    %v311 = vunpack.c.h.b16 %v151
    %v312 = vunpack.c.l.b16 %v152
    %v313 = vpack.c.b16 %v268, %v263
    %v314 = vpack.c.b16 %v269, %v264
    %v315 = vpack.c.b16 %v270, %v265
    %v316 = vpack.c.b16 %v271, %v266
    %v317 = vpack.c.b16 %v272, %v267
    %v318 = vpack.c.b16 %v278, %v273
    %v319 = vpack.c.b16 %v279, %v274
    %v320 = vpack.c.b16 %v280, %v275
    %v321 = vpack.c.b16 %v281, %v276
    %v322 = vpack.c.b16 %v282, %v277
    %v323 = vpack.c.b16 %v288, %v283
    %v324 = vpack.c.b16 %v289, %v284
    %v325 = vpack.c.b16 %v290, %v285
    %v326 = vpack.c.b16 %v291, %v286
    %v327 = vpack.c.b16 %v292, %v287
    %v328 = vpack.c.b16 %v298, %v293
    %v329 = vpack.c.b16 %v299, %v294
    %v330 = vpack.c.b16 %v300, %v295
    %v331 = vpack.c.b16 %v301, %v296
    %v332 = vpack.c.b16 %v302, %v297
    %v333 = vpack.c.b16 %v308, %v303
    %v334 = vpack.c.b16 %v309, %v304
    %v335 = vpack.c.b16 %v310, %v305
    %v336 = vpack.c.b16 %v311, %v306
    %v337 = vpack.c.b16 %v312, %v307
    %v443 = vunpack.c.l.b16 %v153
    %v444 = vunpack.c.h.b16 %v153
    %v445 = vunpack.c.l.b16 %v154
    %v446 = vunpack.c.h.b16 %v154
    %v447 = vunpack.c.l.b16 %v155
    %v448 = vunpack.c.h.b16 %v155
    %v449 = vunpack.c.l.b16 %v156
    %v450 = vunpack.c.h.b16 %v156
    %v451 = vunpack.c.l.b16 %v157
    %v452 = vunpack.c.h.b16 %v157
    %v453 = vunpack.c.l.b16 %v158
    %v454 = vunpack.c.h.b16 %v158
    %v455 = vunpack.c.l.b16 %v159
    %v456 = vunpack.c.h.b16 %v159
    %v457 = vunpack.c.l.b16 %v160
    %v458 = vunpack.c.h.b16 %v160
    %v459 = vunpack.c.l.b16 %v161
    %v460 = vunpack.c.h.b16 %v161
    %v461 = vunpack.c.l.b16 %v162
    %v462 = vunpack.c.h.b16 %v162
    %v463 = vunpack.c.l.b16 %v163
    %v464 = vunpack.c.h.b16 %v163
    %v465 = vunpack.c.l.b16 %v164
    %v466 = vunpack.c.h.b16 %v164
    %v467 = vunpack.c.l.b16 %v165
    %v468 = vunpack.c.h.b16 %v165
    %v469 = vunpack.c.l.b16 %v166
    %v470 = vunpack.c.h.b16 %v166
    %v471 = vunpack.c.l.b16 %v167
    %v472 = vunpack.c.h.b16 %v167
    %v473 = vunpack.c.l.b16 %v168
    %v474 = vunpack.c.h.b16 %v168
    %v475 = vunpack.c.l.b16 %v169
    %v476 = vunpack.c.h.b16 %v169
    %v477 = vunpack.c.l.b16 %v170
    %v478 = vunpack.c.h.b16 %v170
    %v479 = vunpack.c.l.b16 %v171
    %v480 = vunpack.c.h.b16 %v171
    %v481 = vunpack.c.l.b16 %v172
    %v482 = vunpack.c.h.b16 %v172
    %v483 = vunpack.c.l.b16 %v173
    %v484 = vunpack.c.h.b16 %v173
    %v485 = vunpack.c.l.b16 %v174
    %v486 = vunpack.c.h.b16 %v174
    %v487 = vunpack.c.l.b16 %v175
    %v488 = vunpack.c.h.b16 %v175
    %v489 = vunpack.c.l.b16 %v176
    %v490 = vunpack.c.h.b16 %v176
    %v491 = vunpack.c.l.b16 %v177
    %v492 = vunpack.c.h.b16 %v177
    %v493 = vunpack.c.l.b16 %v178
    %v494 = vunpack.c.h.b16 %v178
    %v495 = vunpack.c.l.b16 %v179
    %v496 = vunpack.c.h.b16 %v179
    %v497 = vunpack.c.l.b16 %v180
    %v498 = vunpack.c.h.b16 %v180
    %v499 = vunpack.c.l.b16 %v181
    %v500 = vunpack.c.h.b16 %v181
    %v501 = vunpack.c.l.b16 %v182
    %v502 = vunpack.c.h.b16 %v182
    %v503 = vunpack.c.l.b16 %v183
    %v504 = vunpack.c.h.b16 %v183
    %v505 = vunpack.c.l.b16 %v184
    %v506 = vunpack.c.h.b16 %v184
    %v507 = vunpack.c.l.b16 %v185
    %v508 = vunpack.c.h.b16 %v185
    %v509 = vunpack.c.l.b16 %v186
    %v510 = vunpack.c.h.b16 %v186
    %v511 = vunpack.c.l.b16 %v187
    %v512 = vunpack.c.h.b16 %v187
    %v513 = vunpack.c.l.b16 %v188
    %v514 = vunpack.c.h.b16 %v188
    %v515 = vunpack.c.l.b16 %v189
    %v516 = vunpack.c.h.b16 %v189
    %v517 = vunpack.c.l.b16 %v190
    %v518 = vunpack.c.h.b16 %v190
    %v519 = vunpack.c.l.b16 %v191
    %v520 = vunpack.c.h.b16 %v191
    %v521 = vunpack.c.l.b16 %v192
    %v522 = vunpack.c.h.b16 %v192
    %v523 = vunpack.c.l.b16 %v193
    %v524 = vunpack.c.h.b16 %v193
    %v525 = vunpack.c.l.b16 %v194
    %v526 = vunpack.c.h.b16 %v194
    %v527 = vunpack.c.l.b16 %v195
    %v528 = vunpack.c.h.b16 %v195
    %v529 = vunpack.c.l.b16 %v196
    %v530 = vunpack.c.h.b16 %v196
    %v531 = vunpack.c.l.b16 %v197
    %v532 = vunpack.c.h.b16 %v197
    %v533 = vunpack.c.l.b16 %v198
    %v534 = vunpack.c.h.b16 %v198
    %v535 = vunpack.c.l.b16 %v199
    %v536 = vunpack.c.h.b16 %v199
    %v537 = vunpack.c.l.b16 %v200
    %v538 = vunpack.c.h.b16 %v200
    %v539 = vunpack.c.l.b16 %v201
    %v540 = vunpack.c.h.b16 %v201
    %v541 = vunpack.c.l.b16 %v202
    %v542 = vunpack.c.h.b16 %v202
    %v543 = vunpack.c.l.b16 %v203
    %v544 = vunpack.c.h.b16 %v203
    %v545 = vunpack.c.l.b16 %v204
    %v546 = vunpack.c.h.b16 %v204
    %v547 = vunpack.c.l.b16 %v205
    %v548 = vunpack.c.h.b16 %v205
    %v549 = vunpack.c.l.b16 %v206
    %v550 = vunpack.c.h.b16 %v206
    %v551 = vunpack.c.l.b16 %v207
    %v552 = vunpack.c.h.b16 %v207
    %v553 = vunpack.c.l.b16 %v208
    %v554 = vunpack.c.h.b16 %v208
    %v555 = vunpack.c.l.b16 %v209
    %v556 = vunpack.c.h.b16 %v209
    %v557 = vunpack.c.l.b16 %v210
    %v558 = vunpack.c.h.b16 %v210
    %v559 = vunpack.c.l.b16 %v211
    %v560 = vunpack.c.h.b16 %v211
    %v561 = vunpack.c.l.b16 %v212
    %v562 = vunpack.c.h.b16 %v212
    %v563 = vunpack.c.l.b16 %v213
    %v564 = vunpack.c.h.b16 %v213
    %v565 = vunpack.c.l.b16 %v214
    %v566 = vunpack.c.h.b16 %v214
    %v567 = vunpack.c.l.b16 %v215
    %v568 = vunpack.c.h.b16 %v215
    %v569 = vunpack.c.l.b16 %v216
    %v570 = vunpack.c.h.b16 %v216
    %v571 = vunpack.c.l.b16 %v217
    %v572 = vunpack.c.h.b16 %v217
    %v573 = vunpack.c.l.b16 %v218
    %v574 = vunpack.c.h.b16 %v218
    %v575 = vunpack.c.l.b16 %v219
    %v576 = vunpack.c.h.b16 %v219
    %v577 = vunpack.c.l.b16 %v220
    %v578 = vunpack.c.h.b16 %v220
    %v579 = vunpack.c.l.b16 %v221
    %v580 = vunpack.c.h.b16 %v221
    %v581 = vunpack.c.l.b16 %v222
    %v582 = vunpack.c.h.b16 %v222
    %v583 = vunpack.c.l.b16 %v223
    %v584 = vunpack.c.h.b16 %v223
    %v585 = vunpack.c.l.b16 %v224
    %v586 = vunpack.c.h.b16 %v224
    %v587 = vunpack.c.l.b16 %v225
    %v588 = vunpack.c.h.b16 %v225
    %v589 = vunpack.c.l.b16 %v226
    %v590 = vunpack.c.h.b16 %v226
    %v591 = vunpack.c.l.b16 %v227
    %v592 = vunpack.c.h.b16 %v227
    %v593 = vunpack.c.l.b16 %v228
    %v594 = vunpack.c.h.b16 %v228
    %v595 = vunpack.c.l.b16 %v229
    %v596 = vunpack.c.h.b16 %v229
    %v597 = vunpack.c.l.b16 %v230
    %v598 = vunpack.c.h.b16 %v230
    %v599 = vunpack.c.l.b16 %v231
    %v600 = vunpack.c.h.b16 %v231
    %v601 = vunpack.c.l.b16 %v232
    %v602 = vunpack.c.h.b16 %v232
    %v603 = vpack.c.b16 %v445, %v443
    %v604 = vpack.c.b16 %v446, %v444
    %v605 = vpack.c.b16 %v449, %v447
    %v606 = vpack.c.b16 %v450, %v448
    %v607 = vpack.c.b16 %v453, %v451
    %v608 = vpack.c.b16 %v454, %v452
    %v609 = vpack.c.b16 %v457, %v455
    %v610 = vpack.c.b16 %v458, %v456
    %v611 = vpack.c.b16 %v461, %v459
    %v612 = vpack.c.b16 %v462, %v460
    %v613 = vpack.c.b16 %v465, %v463
    %v614 = vpack.c.b16 %v466, %v464
    %v615 = vpack.c.b16 %v469, %v467
    %v616 = vpack.c.b16 %v470, %v468
    %v617 = vpack.c.b16 %v473, %v471
    %v618 = vpack.c.b16 %v474, %v472
    %v619 = vpack.c.b16 %v477, %v475
    %v620 = vpack.c.b16 %v478, %v476
    %v621 = vpack.c.b16 %v481, %v479
    %v622 = vpack.c.b16 %v482, %v480
    %v623 = vpack.c.b16 %v485, %v483
    %v624 = vpack.c.b16 %v486, %v484
    %v625 = vpack.c.b16 %v489, %v487
    %v626 = vpack.c.b16 %v490, %v488
    %v627 = vpack.c.b16 %v493, %v491
    %v628 = vpack.c.b16 %v494, %v492
    %v629 = vpack.c.b16 %v497, %v495
    %v630 = vpack.c.b16 %v498, %v496
    %v631 = vpack.c.b16 %v501, %v499
    %v632 = vpack.c.b16 %v502, %v500
    %v633 = vpack.c.b16 %v505, %v503
    %v634 = vpack.c.b16 %v506, %v504
    %v635 = vpack.c.b16 %v509, %v507
    %v636 = vpack.c.b16 %v510, %v508
    %v637 = vpack.c.b16 %v513, %v511
    %v638 = vpack.c.b16 %v514, %v512
    %v639 = vpack.c.b16 %v517, %v515
    %v640 = vpack.c.b16 %v518, %v516
    %v641 = vpack.c.b16 %v521, %v519
    %v642 = vpack.c.b16 %v522, %v520
    %v643 = vpack.c.b16 %v525, %v523
    %v644 = vpack.c.b16 %v526, %v524
    %v645 = vpack.c.b16 %v529, %v527
    %v646 = vpack.c.b16 %v530, %v528
    %v647 = vpack.c.b16 %v533, %v531
    %v648 = vpack.c.b16 %v534, %v532
    %v649 = vpack.c.b16 %v537, %v535
    %v650 = vpack.c.b16 %v538, %v536
    %v651 = vpack.c.b16 %v541, %v539
    %v652 = vpack.c.b16 %v542, %v540
    %v653 = vpack.c.b16 %v545, %v543
    %v654 = vpack.c.b16 %v546, %v544
    %v655 = vpack.c.b16 %v549, %v547
    %v656 = vpack.c.b16 %v550, %v548
    %v657 = vpack.c.b16 %v553, %v551
    %v658 = vpack.c.b16 %v554, %v552
    %v659 = vpack.c.b16 %v557, %v555
    %v660 = vpack.c.b16 %v558, %v556
    %v661 = vpack.c.b16 %v561, %v559
    %v662 = vpack.c.b16 %v562, %v560
    %v663 = vpack.c.b16 %v565, %v563
    %v664 = vpack.c.b16 %v566, %v564
    %v665 = vpack.c.b16 %v569, %v567
    %v666 = vpack.c.b16 %v570, %v568
    %v667 = vpack.c.b16 %v573, %v571
    %v668 = vpack.c.b16 %v574, %v572
    %v669 = vpack.c.b16 %v577, %v575
    %v670 = vpack.c.b16 %v578, %v576
    %v671 = vpack.c.b16 %v581, %v579
    %v672 = vpack.c.b16 %v582, %v580
    %v673 = vpack.c.b16 %v585, %v583
    %v674 = vpack.c.b16 %v586, %v584
    %v675 = vpack.c.b16 %v589, %v587
    %v676 = vpack.c.b16 %v590, %v588
    %v677 = vpack.c.b16 %v593, %v591
    %v678 = vpack.c.b16 %v594, %v592
    %v679 = vpack.c.b16 %v597, %v595
    %v680 = vpack.c.b16 %v598, %v596
    %v681 = vpack.c.b16 %v601, %v599
    %v682 = vpack.c.b16 %v602, %v600
    %763 = vmatpush.bf16.msra.mxu0 %v617
    %764 = vmatpush.bf16.msra.mxu0 %v615
    %765 = vmatpush.bf16.msra.mxu0 %v613
    %766 = vmatpush.bf16.msra.mxu0 %v611
    %767 = vmatpush.bf16.msra.mxu0 %v609
    %768 = vmatpush.bf16.msra.mxu0 %v607
    %769 = vmatpush.bf16.msra.mxu0 %v605
    %770 = vmatpush.bf16.msra.mxu0 %v603
    %771 = vmatmul.bf16.gmra.mxu0 %v313
    %v772 = vpop.f32.mrf.mxu0
    %v773 = vadd.f32 0.0, %v772
    %v774 = vpop.f32.mrf.mxu0
    %v775 = vadd.f32 0.0, %v774
    %776 = vmatmul.bf16.gmra.mxu0 %v318
    %v777 = vpop.f32.mrf.mxu0
    %v778 = vadd.f32 0.0, %v777
    %v779 = vpop.f32.mrf.mxu0
    %v780 = vadd.f32 0.0, %v779
    %781 = vmatmul.bf16.gmra.mxu0 %v323
    %v782 = vpop.f32.mrf.mxu0
    %v783 = vadd.f32 0.0, %v782
    %v784 = vpop.f32.mrf.mxu0
    %v785 = vadd.f32 0.0, %v784
    %786 = vmatmul.bf16.gmra.mxu0 %v328
    %v787 = vpop.f32.mrf.mxu0
    %v788 = vadd.f32 0.0, %v787
    %v789 = vpop.f32.mrf.mxu0
    %v790 = vadd.f32 0.0, %v789
    %791 = vmatmul.bf16.gmra.mxu0 %v333
    %v792 = vpop.f32.mrf.mxu0
    %v793 = vadd.f32 0.0, %v792
    %v794 = vpop.f32.mrf.mxu0
    %v795 = vadd.f32 0.0, %v794
    %796 = vdwg.mxu0
    %797 = vmatpush.bf16.msra.mxu0 %v633
    %798 = vmatpush.bf16.msra.mxu0 %v631
    %799 = vmatpush.bf16.msra.mxu0 %v629
    %800 = vmatpush.bf16.msra.mxu0 %v627
    %801 = vmatpush.bf16.msra.mxu0 %v625
    %802 = vmatpush.bf16.msra.mxu0 %v623
    %803 = vmatpush.bf16.msra.mxu0 %v621
    %804 = vmatpush.bf16.msra.mxu0 %v619
    %805 = vmatmul.bf16.gmra.mxu0 %v314
    %v806 = vpop.f32.mrf.mxu0
    %v807 = vadd.f32 %v773, %v806
    %v808 = vpop.f32.mrf.mxu0
    %v809 = vadd.f32 %v775, %v808
    %810 = vmatmul.bf16.gmra.mxu0 %v319
    %v811 = vpop.f32.mrf.mxu0
    %v812 = vadd.f32 %v778, %v811
    %v813 = vpop.f32.mrf.mxu0
    %v814 = vadd.f32 %v780, %v813
    %815 = vmatmul.bf16.gmra.mxu0 %v324
    %v816 = vpop.f32.mrf.mxu0
    %v817 = vadd.f32 %v783, %v816
    %v818 = vpop.f32.mrf.mxu0
    %v819 = vadd.f32 %v785, %v818
    %820 = vmatmul.bf16.gmra.mxu0 %v329
    %v821 = vpop.f32.mrf.mxu0
    %v822 = vadd.f32 %v788, %v821
    %v823 = vpop.f32.mrf.mxu0
    %v824 = vadd.f32 %v790, %v823
    %825 = vmatmul.bf16.gmra.mxu0 %v334
    %v826 = vpop.f32.mrf.mxu0
    %v827 = vadd.f32 %v793, %v826
    %v828 = vpop.f32.mrf.mxu0
    %v829 = vadd.f32 %v795, %v828
    %830 = vdwg.mxu0
    %831 = vmatpush.bf16.msra.mxu0 %v649
    %832 = vmatpush.bf16.msra.mxu0 %v647
    %833 = vmatpush.bf16.msra.mxu0 %v645
    %834 = vmatpush.bf16.msra.mxu0 %v643
    %835 = vmatpush.bf16.msra.mxu0 %v641
    %836 = vmatpush.bf16.msra.mxu0 %v639
    %837 = vmatpush.bf16.msra.mxu0 %v637
    %838 = vmatpush.bf16.msra.mxu0 %v635
    %839 = vmatmul.bf16.gmra.mxu0 %v315
    %v840 = vpop.f32.mrf.mxu0
    %v841 = vadd.f32 %v807, %v840
    %v842 = vpop.f32.mrf.mxu0
    %v843 = vadd.f32 %v809, %v842
    %844 = vmatmul.bf16.gmra.mxu0 %v320
    %v845 = vpop.f32.mrf.mxu0
    %v846 = vadd.f32 %v812, %v845
    %v847 = vpop.f32.mrf.mxu0
    %v848 = vadd.f32 %v814, %v847
    %849 = vmatmul.bf16.gmra.mxu0 %v325
    %v850 = vpop.f32.mrf.mxu0
    %v851 = vadd.f32 %v817, %v850
    %v852 = vpop.f32.mrf.mxu0
    %v853 = vadd.f32 %v819, %v852
    %854 = vmatmul.bf16.gmra.mxu0 %v330
    %v855 = vpop.f32.mrf.mxu0
    %v856 = vadd.f32 %v822, %v855
    %v857 = vpop.f32.mrf.mxu0
    %v858 = vadd.f32 %v824, %v857
    %859 = vmatmul.bf16.gmra.mxu0 %v335
    %v860 = vpop.f32.mrf.mxu0
    %v861 = vadd.f32 %v827, %v860
    %v862 = vpop.f32.mrf.mxu0
    %v863 = vadd.f32 %v829, %v862
    %864 = vdwg.mxu0
    %865 = vmatpush.bf16.msra.mxu0 %v665
    %866 = vmatpush.bf16.msra.mxu0 %v663
    %867 = vmatpush.bf16.msra.mxu0 %v661
    %868 = vmatpush.bf16.msra.mxu0 %v659
    %869 = vmatpush.bf16.msra.mxu0 %v657
    %870 = vmatpush.bf16.msra.mxu0 %v655
    %871 = vmatpush.bf16.msra.mxu0 %v653
    %872 = vmatpush.bf16.msra.mxu0 %v651
    %873 = vmatmul.bf16.gmra.mxu0 %v316
    %v874 = vpop.f32.mrf.mxu0
    %v875 = vadd.f32 %v841, %v874
    %v876 = vpop.f32.mrf.mxu0
    %v877 = vadd.f32 %v843, %v876
    %878 = vmatmul.bf16.gmra.mxu0 %v321
    %v879 = vpop.f32.mrf.mxu0
    %v880 = vadd.f32 %v846, %v879
    %v881 = vpop.f32.mrf.mxu0
    %v882 = vadd.f32 %v848, %v881
    %883 = vmatmul.bf16.gmra.mxu0 %v326
    %v884 = vpop.f32.mrf.mxu0
    %v885 = vadd.f32 %v851, %v884
    %v886 = vpop.f32.mrf.mxu0
    %v887 = vadd.f32 %v853, %v886
    %888 = vmatmul.bf16.gmra.mxu0 %v331
    %v889 = vpop.f32.mrf.mxu0
    %v890 = vadd.f32 %v856, %v889
    %v891 = vpop.f32.mrf.mxu0
    %v892 = vadd.f32 %v858, %v891
    %893 = vmatmul.bf16.gmra.mxu0 %v336
    %v894 = vpop.f32.mrf.mxu0
    %v895 = vadd.f32 %v861, %v894
    %v896 = vpop.f32.mrf.mxu0
    %v897 = vadd.f32 %v863, %v896
    %898 = vdwg.mxu0
    %899 = vmatpush.bf16.msra.mxu0 %v681
    %900 = vmatpush.bf16.msra.mxu0 %v679
    %901 = vmatpush.bf16.msra.mxu0 %v677
    %902 = vmatpush.bf16.msra.mxu0 %v675
    %903 = vmatpush.bf16.msra.mxu0 %v673
    %904 = vmatpush.bf16.msra.mxu0 %v671
    %905 = vmatpush.bf16.msra.mxu0 %v669
    %906 = vmatpush.bf16.msra.mxu0 %v667
    %907 = vmatmul.bf16.gmra.mxu0 %v317
    %v908 = vpop.f32.mrf.mxu0
    %v909 = vadd.f32 %v875, %v908
    %v910 = vpop.f32.mrf.mxu0
    %v911 = vadd.f32 %v877, %v910
    %912 = vmatmul.bf16.gmra.mxu0 %v322
    %v913 = vpop.f32.mrf.mxu0
    %v914 = vadd.f32 %v880, %v913
    %v915 = vpop.f32.mrf.mxu0
    %v916 = vadd.f32 %v882, %v915
    %917 = vmatmul.bf16.gmra.mxu0 %v327
    %v918 = vpop.f32.mrf.mxu0
    %v919 = vadd.f32 %v885, %v918
    %v920 = vpop.f32.mrf.mxu0
    %v921 = vadd.f32 %v887, %v920
    %922 = vmatmul.bf16.gmra.mxu0 %v332
    %v923 = vpop.f32.mrf.mxu0
    %v924 = vadd.f32 %v890, %v923
    %v925 = vpop.f32.mrf.mxu0
    %v926 = vadd.f32 %v892, %v925
    %927 = vmatmul.bf16.gmra.mxu0 %v337
    %v928 = vpop.f32.mrf.mxu0
    %v929 = vadd.f32 %v895, %v928
    %v930 = vpop.f32.mrf.mxu0
    %v931 = vadd.f32 %v897, %v930
    %932 = vdwg.mxu0
    %933 = vmatpush.bf16.msra.mxu0 %v618
    %934 = vmatpush.bf16.msra.mxu0 %v616
    %935 = vmatpush.bf16.msra.mxu0 %v614
    %936 = vmatpush.bf16.msra.mxu0 %v612
    %937 = vmatpush.bf16.msra.mxu0 %v610
    %938 = vmatpush.bf16.msra.mxu0 %v608
    %939 = vmatpush.bf16.msra.mxu0 %v606
    %940 = vmatpush.bf16.msra.mxu0 %v604
    %941 = vmatmul.bf16.gmra.mxu0 %v313
    %v942 = vpop.f32.mrf.mxu0
    %v943 = vadd.f32 0.0, %v942
    %v944 = vpop.f32.mrf.mxu0
    %v945 = vadd.f32 0.0, %v944
    %946 = vmatmul.bf16.gmra.mxu0 %v318
    %v947 = vpop.f32.mrf.mxu0
    %v948 = vadd.f32 0.0, %v947
    %v949 = vpop.f32.mrf.mxu0
    %v950 = vadd.f32 0.0, %v949
    %951 = vmatmul.bf16.gmra.mxu0 %v323
    %v952 = vpop.f32.mrf.mxu0
    %v953 = vadd.f32 0.0, %v952
    %v954 = vpop.f32.mrf.mxu0
    %v955 = vadd.f32 0.0, %v954
    %956 = vmatmul.bf16.gmra.mxu0 %v328
    %v957 = vpop.f32.mrf.mxu0
    %v958 = vadd.f32 0.0, %v957
    %v959 = vpop.f32.mrf.mxu0
    %v960 = vadd.f32 0.0, %v959
    %961 = vmatmul.bf16.gmra.mxu0 %v333
    %v962 = vpop.f32.mrf.mxu0
    %v963 = vadd.f32 0.0, %v962
    %v964 = vpop.f32.mrf.mxu0
    %v965 = vadd.f32 0.0, %v964
    %966 = vdwg.mxu0
    %967 = vmatpush.bf16.msra.mxu0 %v634
    %968 = vmatpush.bf16.msra.mxu0 %v632
    %969 = vmatpush.bf16.msra.mxu0 %v630
    %970 = vmatpush.bf16.msra.mxu0 %v628
    %971 = vmatpush.bf16.msra.mxu0 %v626
    %972 = vmatpush.bf16.msra.mxu0 %v624
    %973 = vmatpush.bf16.msra.mxu0 %v622
    %974 = vmatpush.bf16.msra.mxu0 %v620
    %975 = vmatmul.bf16.gmra.mxu0 %v314
    %v976 = vpop.f32.mrf.mxu0
    %v977 = vadd.f32 %v943, %v976
    %v978 = vpop.f32.mrf.mxu0
    %v979 = vadd.f32 %v945, %v978
    %980 = vmatmul.bf16.gmra.mxu0 %v319
    %v981 = vpop.f32.mrf.mxu0
    %v982 = vadd.f32 %v948, %v981
    %v983 = vpop.f32.mrf.mxu0
    %v984 = vadd.f32 %v950, %v983
    %985 = vmatmul.bf16.gmra.mxu0 %v324
    %v986 = vpop.f32.mrf.mxu0
    %v987 = vadd.f32 %v953, %v986
    %v988 = vpop.f32.mrf.mxu0
    %v989 = vadd.f32 %v955, %v988
    %990 = vmatmul.bf16.gmra.mxu0 %v329
    %v991 = vpop.f32.mrf.mxu0
    %v992 = vadd.f32 %v958, %v991
    %v993 = vpop.f32.mrf.mxu0
    %v994 = vadd.f32 %v960, %v993
    %995 = vmatmul.bf16.gmra.mxu0 %v334
    %v996 = vpop.f32.mrf.mxu0
    %v997 = vadd.f32 %v963, %v996
    %v998 = vpop.f32.mrf.mxu0
    %v999 = vadd.f32 %v965, %v998
    %1000 = vdwg.mxu0
    %1001 = vmatpush.bf16.msra.mxu0 %v650
    %1002 = vmatpush.bf16.msra.mxu0 %v648
    %1003 = vmatpush.bf16.msra.mxu0 %v646
    %1004 = vmatpush.bf16.msra.mxu0 %v644
    %1005 = vmatpush.bf16.msra.mxu0 %v642
    %1006 = vmatpush.bf16.msra.mxu0 %v640
    %1007 = vmatpush.bf16.msra.mxu0 %v638
    %1008 = vmatpush.bf16.msra.mxu0 %v636
    %1009 = vmatmul.bf16.gmra.mxu0 %v315
    %v1010 = vpop.f32.mrf.mxu0
    %v1011 = vadd.f32 %v977, %v1010
    %v1012 = vpop.f32.mrf.mxu0
    %v1013 = vadd.f32 %v979, %v1012
    %1014 = vmatmul.bf16.gmra.mxu0 %v320
    %v1015 = vpop.f32.mrf.mxu0
    %v1016 = vadd.f32 %v982, %v1015
    %v1017 = vpop.f32.mrf.mxu0
    %v1018 = vadd.f32 %v984, %v1017
    %1019 = vmatmul.bf16.gmra.mxu0 %v325
    %v1020 = vpop.f32.mrf.mxu0
    %v1021 = vadd.f32 %v987, %v1020
    %v1022 = vpop.f32.mrf.mxu0
    %v1023 = vadd.f32 %v989, %v1022
    %1024 = vmatmul.bf16.gmra.mxu0 %v330
    %v1025 = vpop.f32.mrf.mxu0
    %v1026 = vadd.f32 %v992, %v1025
    %v1027 = vpop.f32.mrf.mxu0
    %v1028 = vadd.f32 %v994, %v1027
    %1029 = vmatmul.bf16.gmra.mxu0 %v335
    %v1030 = vpop.f32.mrf.mxu0
    %v1031 = vadd.f32 %v997, %v1030
    %v1032 = vpop.f32.mrf.mxu0
    %v1033 = vadd.f32 %v999, %v1032
    %1034 = vdwg.mxu0
    %1035 = vmatpush.bf16.msra.mxu0 %v666
    %1036 = vmatpush.bf16.msra.mxu0 %v664
    %1037 = vmatpush.bf16.msra.mxu0 %v662
    %1038 = vmatpush.bf16.msra.mxu0 %v660
    %1039 = vmatpush.bf16.msra.mxu0 %v658
    %1040 = vmatpush.bf16.msra.mxu0 %v656
    %1041 = vmatpush.bf16.msra.mxu0 %v654
    %1042 = vmatpush.bf16.msra.mxu0 %v652
    %1043 = vmatmul.bf16.gmra.mxu0 %v316
    %v1044 = vpop.f32.mrf.mxu0
    %v1045 = vadd.f32 %v1011, %v1044
    %v1046 = vpop.f32.mrf.mxu0
    %v1047 = vadd.f32 %v1013, %v1046
    %1048 = vmatmul.bf16.gmra.mxu0 %v321
    %v1049 = vpop.f32.mrf.mxu0
    %v1050 = vadd.f32 %v1016, %v1049
    %v1051 = vpop.f32.mrf.mxu0
    %v1052 = vadd.f32 %v1018, %v1051
    %1053 = vmatmul.bf16.gmra.mxu0 %v326
    %v1054 = vpop.f32.mrf.mxu0
    %v1055 = vadd.f32 %v1021, %v1054
    %v1056 = vpop.f32.mrf.mxu0
    %v1057 = vadd.f32 %v1023, %v1056
    %1058 = vmatmul.bf16.gmra.mxu0 %v331
    %v1059 = vpop.f32.mrf.mxu0
    %v1060 = vadd.f32 %v1026, %v1059
    %v1061 = vpop.f32.mrf.mxu0
    %v1062 = vadd.f32 %v1028, %v1061
    %1063 = vmatmul.bf16.gmra.mxu0 %v336
    %v1064 = vpop.f32.mrf.mxu0
    %v1065 = vadd.f32 %v1031, %v1064
    %v1066 = vpop.f32.mrf.mxu0
    %v1067 = vadd.f32 %v1033, %v1066
    %1068 = vdwg.mxu0
    %1069 = vmatpush.bf16.msra.mxu0 %v682
    %1070 = vmatpush.bf16.msra.mxu0 %v680
    %1071 = vmatpush.bf16.msra.mxu0 %v678
    %1072 = vmatpush.bf16.msra.mxu0 %v676
    %1073 = vmatpush.bf16.msra.mxu0 %v674
    %1074 = vmatpush.bf16.msra.mxu0 %v672
    %1075 = vmatpush.bf16.msra.mxu0 %v670
    %1076 = vmatpush.bf16.msra.mxu0 %v668
    %1077 = vmatmul.bf16.gmra.mxu0 %v317
    %v1078 = vpop.f32.mrf.mxu0
    %v1079 = vadd.f32 %v1045, %v1078
    %v1080 = vpop.f32.mrf.mxu0
    %v1081 = vadd.f32 %v1047, %v1080
    %1082 = vmatmul.bf16.gmra.mxu0 %v322
    %v1083 = vpop.f32.mrf.mxu0
    %v1084 = vadd.f32 %v1050, %v1083
    %v1085 = vpop.f32.mrf.mxu0
    %v1086 = vadd.f32 %v1052, %v1085
    %1087 = vmatmul.bf16.gmra.mxu0 %v327
    %v1088 = vpop.f32.mrf.mxu0
    %v1089 = vadd.f32 %v1055, %v1088
    %v1090 = vpop.f32.mrf.mxu0
    %v1091 = vadd.f32 %v1057, %v1090
    %1092 = vmatmul.bf16.gmra.mxu0 %v332
    %v1093 = vpop.f32.mrf.mxu0
    %v1094 = vadd.f32 %v1060, %v1093
    %v1095 = vpop.f32.mrf.mxu0
    %v1096 = vadd.f32 %v1062, %v1095
    %1097 = vmatmul.bf16.gmra.mxu0 %v337
    %v1098 = vpop.f32.mrf.mxu0
    %v1099 = vadd.f32 %v1065, %v1098
    %v1100 = vpop.f32.mrf.mxu0
    %v1101 = vadd.f32 %v1067, %v1100
    %1102 = vdwg.mxu0
    %v1103 = vadd.f32 %v103, %v909
    %v1104 = vadd.f32 %v104, %v1079
    %v1105 = vadd.f32 %v105, %v911
    %v1106 = vadd.f32 %v106, %v1081
    %v1107 = vadd.f32 %v107, %v914
    %v1108 = vadd.f32 %v108, %v1084
    %v1109 = vadd.f32 %v109, %v916
    %v1110 = vadd.f32 %v110, %v1086
    %v1111 = vadd.f32 %v111, %v919
    %v1112 = vadd.f32 %v112, %v1089
    %v1113 = vadd.f32 %v113, %v921
    %v1114 = vadd.f32 %v114, %v1091
    %v1115 = vadd.f32 %v115, %v924
    %v1116 = vadd.f32 %v116, %v1094
    %v1117 = vadd.f32 %v117, %v926
    %v1118 = vadd.f32 %v118, %v1096
    %v1119 = vadd.f32 %v119, %v929
    %v1120 = vadd.f32 %v120, %v1099
    %v1121 = vadd.f32 %v121, %v931
    %v1122 = vadd.f32 %v122, %v1101
    %1123 = vst [vmem:[#allocation2] sm:$0xff] %v1103
    %1124 = vst [vmem:[#allocation2 + $0x8] sm:$0xff] %v1104
    %1125 = vst [vmem:[#allocation2 + $0x10] sm:$0xff] %v1105
    %1126 = vst [vmem:[#allocation2 + $0x18] sm:$0xff] %v1106
    %1127 = vst [vmem:[#allocation2 + $0x20] sm:$0xff] %v1107
    %1128 = vst [vmem:[#allocation2 + $0x28] sm:$0xff] %v1108
    %1129 = vst [vmem:[#allocation2 + $0x30] sm:$0xff] %v1109
    %1130 = vst [vmem:[#allocation2 + $0x38] sm:$0xff] %v1110
    %1131 = vst [vmem:[#allocation2 + $0x40] sm:$0xff] %v1111
    %1132 = vst [vmem:[#allocation2 + $0x48] sm:$0xff] %v1112
    %1133 = vst [vmem:[#allocation2 + $0x50] sm:$0xff] %v1113
    %1134 = vst [vmem:[#allocation2 + $0x58] sm:$0xff] %v1114
    %1135 = vst [vmem:[#allocation2 + $0x60] sm:$0xff] %v1115
    %1136 = vst [vmem:[#allocation2 + $0x68] sm:$0xff] %v1116
    %1137 = vst [vmem:[#allocation2 + $0x70] sm:$0xff] %v1117
    %1138 = vst [vmem:[#allocation2 + $0x78] sm:$0xff] %v1118
    %1139 = vst [vmem:[#allocation2 + $0x80] sm:$0xff] %v1119
    %1140 = vst [vmem:[#allocation2 + $0x88] sm:$0xff] %v1120
    %1141 = vst [vmem:[#allocation2 + $0x90] sm:$0xff] %v1121
    %1142 = vst [vmem:[#allocation2 + $0x98] sm:$0xff] %v1122
    // Predicated region
    $region38: #{tpu_custom_call.1} parent=1 // pred_check
      %p1143 = pneg %p79
    $region39: #{tpu_custom_call.1} parent=1 // pred_check_branch
      %1145 = sbr.rel (%p1143) target = $region41
    $region40: #{tpu_custom_call.1} parent=1 // pred_region
      %v1146 = vld [vmem:[#allocation2] sm:$0xff]
      %v1147 = vld [vmem:[#allocation2 + $0x8] sm:$0xff]
      %v1148 = vld [vmem:[#allocation2 + $0x10] sm:$0xff]
      %v1149 = vld [vmem:[#allocation2 + $0x18] sm:$0xff]
      %v1150 = vld [vmem:[#allocation2 + $0x20] sm:$0xff]
      %v1151 = vld [vmem:[#allocation2 + $0x28] sm:$0xff]
      %v1152 = vld [vmem:[#allocation2 + $0x30] sm:$0xff]
      %v1153 = vld [vmem:[#allocation2 + $0x38] sm:$0xff]
      %v1154 = vld [vmem:[#allocation2 + $0x40] sm:$0xff]
      %v1155 = vld [vmem:[#allocation2 + $0x48] sm:$0xff]
      %v1156 = vld [vmem:[#allocation2 + $0x50] sm:$0xff]
      %v1157 = vld [vmem:[#allocation2 + $0x58] sm:$0xff]
      %v1158 = vld [vmem:[#allocation2 + $0x60] sm:$0xff]
      %v1159 = vld [vmem:[#allocation2 + $0x68] sm:$0xff]
      %v1160 = vld [vmem:[#allocation2 + $0x70] sm:$0xff]
      %v1161 = vld [vmem:[#allocation2 + $0x78] sm:$0xff]
      %v1162 = vld [vmem:[#allocation2 + $0x80] sm:$0xff]
      %v1163 = vld [vmem:[#allocation2 + $0x88] sm:$0xff]
      %v1164 = vld [vmem:[#allocation2 + $0x90] sm:$0xff]
      %v1165 = vld [vmem:[#allocation2 + $0x98] sm:$0xff]
      %v1166 = vld [vmem:[#allocation8] sm:$0x3]
      %v1168 = vperm.slane %v1166, 0
      %v1169 = vperm.slane %v1166, 1
      %v1172 = vadd.f32 %v1146, %v1168
      %v1173 = vadd.f32 %v1147, %v1169
      %v1174 = vadd.f32 %v1148, %v1168
      %v1175 = vadd.f32 %v1149, %v1169
      %v1176 = vadd.f32 %v1150, %v1168
      %v1177 = vadd.f32 %v1151, %v1169
      %v1178 = vadd.f32 %v1152, %v1168
      %v1179 = vadd.f32 %v1153, %v1169
      %v1180 = vadd.f32 %v1154, %v1168
      %v1181 = vadd.f32 %v1155, %v1169
      %v1182 = vadd.f32 %v1156, %v1168
      %v1183 = vadd.f32 %v1157, %v1169
      %v1184 = vadd.f32 %v1158, %v1168
      %v1185 = vadd.f32 %v1159, %v1169
      %v1186 = vadd.f32 %v1160, %v1168
      %v1187 = vadd.f32 %v1161, %v1169
      %v1188 = vadd.f32 %v1162, %v1168
      %v1189 = vadd.f32 %v1163, %v1169
      %v1190 = vadd.f32 %v1164, %v1168
      %v1191 = vadd.f32 %v1165, %v1169
      %v1192 = vld [vmem:[#allocation9] sm:$0xff]
      %v1193 = vld [vmem:[#allocation9 + $0x8] sm:$0xff]
      %v1194 = vld [vmem:[#allocation9 + $0x10] sm:$0xff]
      %v1195 = vld [vmem:[#allocation9 + $0x18] sm:$0xff]
      %v1196 = vld [vmem:[#allocation9 + $0x20] sm:$0xff]
      %v1197 = vld [vmem:[#allocation9 + $0x28] sm:$0xff]
      %v1198 = vld [vmem:[#allocation9 + $0x30] sm:$0xff]
      %v1199 = vld [vmem:[#allocation9 + $0x38] sm:$0xff]
      %v1200 = vld [vmem:[#allocation9 + $0x40] sm:$0xff]
      %v1201 = vld [vmem:[#allocation9 + $0x48] sm:$0xff]
      %v1202 = vunpack.c.l.bf16 %v1192
      %v1203 = vunpack.c.h.bf16 %v1192
      %v1204 = vunpack.c.l.bf16 %v1193
      %v1205 = vunpack.c.h.bf16 %v1193
      %v1206 = vunpack.c.l.bf16 %v1194
      %v1207 = vunpack.c.h.bf16 %v1194
      %v1208 = vunpack.c.l.bf16 %v1195
      %v1209 = vunpack.c.h.bf16 %v1195
      %v1210 = vunpack.c.l.bf16 %v1196
      %v1211 = vunpack.c.h.bf16 %v1196
      %v1212 = vunpack.c.l.bf16 %v1197
      %v1213 = vunpack.c.h.bf16 %v1197
      %v1214 = vunpack.c.l.bf16 %v1198
      %v1215 = vunpack.c.h.bf16 %v1198
      %v1216 = vunpack.c.l.bf16 %v1199
      %v1217 = vunpack.c.h.bf16 %v1199
      %v1218 = vunpack.c.l.bf16 %v1200
      %v1219 = vunpack.c.h.bf16 %v1200
      %v1220 = vunpack.c.l.bf16 %v1201
      %v1221 = vunpack.c.h.bf16 %v1201
      %v1222 = vadd.f32 %v1172, %v1202
      %v1223 = vadd.f32 %v1173, %v1203
      %v1224 = vadd.f32 %v1174, %v1204
      %v1225 = vadd.f32 %v1175, %v1205
      %v1226 = vadd.f32 %v1176, %v1206
      %v1227 = vadd.f32 %v1177, %v1207
      %v1228 = vadd.f32 %v1178, %v1208
      %v1229 = vadd.f32 %v1179, %v1209
      %v1230 = vadd.f32 %v1180, %v1210
      %v1231 = vadd.f32 %v1181, %v1211
      %v1232 = vadd.f32 %v1182, %v1212
      %v1233 = vadd.f32 %v1183, %v1213
      %v1234 = vadd.f32 %v1184, %v1214
      %v1235 = vadd.f32 %v1185, %v1215
      %v1236 = vadd.f32 %v1186, %v1216
      %v1237 = vadd.f32 %v1187, %v1217
      %v1238 = vadd.f32 %v1188, %v1218
      %v1239 = vadd.f32 %v1189, %v1219
      %v1240 = vadd.f32 %v1190, %v1220
      %v1241 = vadd.f32 %v1191, %v1221
      %v1242 = vmax.f32 %v1222, 0.0
      %v1243 = vmax.f32 %v1223, 0.0
      %v1244 = vmax.f32 %v1224, 0.0
      %v1245 = vmax.f32 %v1225, 0.0
      %v1246 = vmax.f32 %v1226, 0.0
      %v1247 = vmax.f32 %v1227, 0.0
      %v1248 = vmax.f32 %v1228, 0.0
      %v1249 = vmax.f32 %v1229, 0.0
      %v1250 = vmax.f32 %v1230, 0.0
      %v1251 = vmax.f32 %v1231, 0.0
      %v1252 = vmax.f32 %v1232, 0.0
      %v1253 = vmax.f32 %v1233, 0.0
      %v1254 = vmax.f32 %v1234, 0.0
      %v1255 = vmax.f32 %v1235, 0.0
      %v1256 = vmax.f32 %v1236, 0.0
      %v1257 = vmax.f32 %v1237, 0.0
      %v1258 = vmax.f32 %v1238, 0.0
      %v1259 = vmax.f32 %v1239, 0.0
      %v1260 = vmax.f32 %v1240, 0.0
      %v1261 = vmax.f32 %v1241, 0.0
      %v1262 = vpack.c.bf16 %v1243, %v1242
      %v1263 = vpack.c.bf16 %v1245, %v1244
      %v1264 = vpack.c.bf16 %v1247, %v1246
      %v1265 = vpack.c.bf16 %v1249, %v1248
      %v1266 = vpack.c.bf16 %v1251, %v1250
      %v1267 = vpack.c.bf16 %v1253, %v1252
      %v1268 = vpack.c.bf16 %v1255, %v1254
      %v1269 = vpack.c.bf16 %v1257, %v1256
      %v1270 = vpack.c.bf16 %v1259, %v1258
      %v1271 = vpack.c.bf16 %v1261, %v1260
      %1272 = vst [vmem:[#allocation11] sm:$0xff] %v1262
      %1273 = vst [vmem:[#allocation11 + $0x8] sm:$0xff] %v1263
      %1274 = vst [vmem:[#allocation11 + $0x10] sm:$0xff] %v1264
      %1275 = vst [vmem:[#allocation11 + $0x18] sm:$0xff] %v1265
      %1276 = vst [vmem:[#allocation11 + $0x20] sm:$0xff] %v1266
      %1277 = vst [vmem:[#allocation11 + $0x28] sm:$0xff] %v1267
      %1278 = vst [vmem:[#allocation11 + $0x30] sm:$0xff] %v1268
      %1279 = vst [vmem:[#allocation11 + $0x38] sm:$0xff] %v1269
      %1280 = vst [vmem:[#allocation11 + $0x40] sm:$0xff] %v1270
      %1281 = vst [vmem:[#allocation11 + $0x48] sm:$0xff] %v1271
    $region41: #{tpu_custom_call.1} parent=1 // pred_fallthru
      _
    // Predicated region
    $region42: #{tpu_custom_call.1} parent=1 // pred_check
      _
    $region43: #{tpu_custom_call.1} parent=1 // pred_check_branch
      %1283 = sbr.rel (0) target = $region45
    $region44: #{tpu_custom_call.1} parent=1 // pred_region
      %1285 = vsyncadd [#allocation5], 0
      %s1286 = sshll.u32 [#allocation11], 4
      %s1287 = int_to_ptr.vmem [resolvable:$true] %s1286
      %s1288 = sshll.u32 %s4, 4
      %s1289 = int_to_ptr.hbm [resolvable:$true] %s1288
      %1294 = dma.vmem_to_hbm [thread:$0]  %s1287, 1280, %s1289, [#allocation5], 128, 128, 8
    $region45: #{tpu_custom_call.1} parent=1 // pred_fallthru
      _
    // Predicated region
    $region46: #{tpu_custom_call.1} parent=1 // pred_check
      _
    $region47: #{tpu_custom_call.1} parent=1 // pred_check_branch
      %1296 = sbr.rel (0) target = $region49
    $region48: #{tpu_custom_call.1} parent=1 // pred_region
      %1298 = dma.done [#allocation5], 1280
    $region49: #{tpu_custom_call.1} parent=1 // pred_fallthru
      _
    %1299 = vsyncpa [#allocation4], 1
    %1300 = vsyncpa [#allocation7], 1
    %1301 = vsyncpa [#allocation10], 1
    %1302 = vsyncpa [#allocation5], 1

</llo_original>
